<compile_context>
chip_gen: v7x
topology: tpu7x:2x2x1
jax: 0.10.0
libtpu: 0.0.40
codegen_flags: <defaults>
</compile_context>

<pallas_src>
import functools

import jax
import jax.numpy as jnp
from jax.experimental import pallas as pl
from jax.experimental.pallas import tpu as pltpu


def _pow_gamma(v, gamma):
    """v ** gamma, specialized at trace time (v >= 0, small (1, T) row)."""
    if gamma == 0.0:
        return jnp.ones_like(v)
    if gamma == 1.0:
        return v
    if float(gamma).is_integer() and 2.0 <= gamma <= 8.0:
        out = v
        for _ in range(int(gamma) - 1):
            out = out * v
        return out
    return v ** gamma


def _focal_smooth_kernel(logits_ref, label_ref, out_ref, acc_ref, *,
                         gamma, lb_pos, lb_neg, hw, tile, n_inner):
    """One (batch, split, pixel-tile) grid step.

    logits_ref: (1, C, T)  classes on sublanes, pixels on lanes
    label_ref : (1, 1, T)  native integer dtype
    out_ref   : (1, 1, 1, 1) resident per-(batch, split) partial sum
    acc_ref   : (1, T) f32 lane-shaped running sum (VMEM scratch)
    """
    s_idx = pl.program_id(1)
    t = pl.program_id(2)

    @pl.when(t == 0)
    def _():
        acc_ref[...] = jnp.zeros_like(acc_ref)

    x = logits_ref[0].astype(jnp.float32)              # (C, T), like logits.float()
    y = label_ref[0].astype(jnp.int32)                 # (1, T)
    C, T = x.shape

    # log_softmax over the class (sublane) axis without materializing the full
    # (C, T) log-softmax / softmax; exp is the only full-tile transcendental.
    m = jnp.max(x, axis=0, keepdims=True)              # (1, T)
    sum_x = jnp.sum(x, axis=0, keepdims=True)          # (1, T)
    classes = jax.lax.broadcasted_iota(jnp.int32, (C, T), 0)
    x_t = jnp.sum(jnp.where(classes == y, x, 0.0), axis=0, keepdims=True)

    e = jnp.exp(x - m)                                  # (C, T)
    s = jnp.sum(e, axis=0, keepdims=True)               # (1, T)
    logsum = jnp.log(s)                                 # (1, T)

    logs_t = (x_t - m) - logsum                         # log_softmax at the target class
    sum_logs = (sum_x - C * m) - C * logsum             # sum_c log_softmax_c
    p_t = jnp.exp(logs_t)                               # softmax at the target class
    dl_t = _pow_gamma(jnp.maximum(1.0 - p_t, 0.0), gamma)

    # Non-target classes have difficulty == 1:
    #   loss = -[lb_pos*dl_t*logs_t + lb_neg*(sum_logs - logs_t)]
    loss_pix = -((lb_pos * dl_t - lb_neg) * logs_t + lb_neg * sum_logs)   # (1, T)

    if hw % tile != 0:
        # ragged last pixel tile: garbage lanes are masked before accumulating
        g = s_idx * n_inner + t
        pix = g * tile + jax.lax.broadcasted_iota(jnp.int32, (1, T), 1)
        loss_pix = jnp.where(pix < hw, loss_pix, 0.0)

    acc_ref[...] = acc_ref[...] + loss_pix

    @pl.when(t == n_inner - 1)
    def _():
        out_ref[...] = jnp.sum(acc_ref[...]).reshape(out_ref.shape)


def _choose_pixel_tile(hw, c, itemsize, *, target_dma_bytes=4 << 20,
                       vmem_block_bytes=2 << 20, max_tile=65536, min_tile=256):
    """Pixel-tile heuristic.

    - dtype-aware: target ~4 MiB of logits DMA per block (native dtype).
    - VMEM-aware: in-kernel f32 temporaries carry the class axis padded to the
      8-sublane granularity and the per-pixel rows padded to 8 sublanes, so cap
      roundup(c, 8) * tile * 4 bytes at ~2 MiB.  That keeps the whole working
      set (double-buffered inputs + f32 temporaries + lane accumulator) well
      under v7x's 64 MiB VMEM while amortizing the per-grid-step overhead.
    """
    c_pad = -(-c // 8) * 8
    t = min(target_dma_bytes // (itemsize * c),
            vmem_block_bytes // (4 * c_pad),
            max_tile)
    t = max(t, min_tile)
    t = max((t // 128) * 128, 128)
    if hw <= t:
        return hw            # single full-row block (any lane size is legal)
    return t


def focal_loss_with_smoothing(logits_nchw, label_bhw, *, num_classes,
                              gamma=1, lb_smooth=0.1, ignore_index=None,
                              pixel_tile=None):
    """Equivalent of FocalLossWithSmoothing(num_classes, gamma, lb_smooth)(logits, label)."""
    if ignore_index is not None:
        # TODO(synk): ignore_index path (label==ignore -> loss 0, label reset to 0) not
        #             wired; the module default ignore_index=None is what we implement.
        raise NotImplementedError("ignore_index is not supported")
    if num_classes <= 1:
        raise ValueError("The number of classes must be 2 or higher")
    if gamma < 0:
        raise ValueError("Gamma must be 0 or higher")

    B, C, H, W = logits_nchw.shape
    assert C == num_classes
    HW = H * W
    N = B * HW

    # Free reshapes only: no transpose, no pad, no dtype copy in HBM
    # (bf16 logits stay bf16, labels stay in their native integer dtype).
    x = logits_nchw.reshape(B, C, HW)
    y = label_bhw.reshape(B, 1, HW)

    itemsize = jnp.dtype(logits_nchw.dtype).itemsize
    if pixel_tile is None:
        tile = _choose_pixel_tile(HW, C, itemsize)
    else:
        if pixel_tile >= HW:
            tile = HW
        elif pixel_tile % 128 == 0:
            tile = pixel_tile
        else:
            raise ValueError("pixel_tile must be a multiple of 128 or >= H*W")

    n_tiles = pl.cdiv(HW, tile)

    # Nudge the auto-chosen tile so the pixel-tile count is even: with both the
    # batch and split axes "parallel", even a B==1 workload spans both v7x cores.
    if pixel_tile is None and n_tiles > 1 and n_tiles % 2 == 1:
        alt = ((HW + n_tiles) // (n_tiles + 1) + 127) // 128 * 128
        if 128 <= alt <= tile and pl.cdiv(HW, alt) % 2 == 0:
            tile = alt
            n_tiles = pl.cdiv(HW, alt)

    split = 2 if n_tiles % 2 == 0 else 1
    n_inner = n_tiles // split

    lb_pos = 1.0 - lb_smooth
    lb_neg = lb_smooth / (num_classes - 1)

    kernel = functools.partial(
        _focal_smooth_kernel, gamma=float(gamma), lb_pos=float(lb_pos),
        lb_neg=float(lb_neg), hw=HW, tile=tile, n_inner=n_inner)

    cost = pl.CostEstimate(
        flops=10 * B * C * HW,
        transcendentals=B * (C + 2) * HW,
        bytes_accessed=x.size * itemsize
        + y.size * jnp.dtype(y.dtype).itemsize + B * split * 4)

    partials = pl.pallas_call(
        kernel,
        out_shape=jax.ShapeDtypeStruct((B, split, 1, 1), jnp.float32),
        grid_spec=pltpu.PrefetchScalarGridSpec(
            num_scalar_prefetch=0,
            grid=(B, split, n_inner),
            in_specs=[
                pl.BlockSpec((1, C, tile),
                             lambda b, s, t: (b, 0, s * n_inner + t)),   # logits
                pl.BlockSpec((1, 1, tile),
                             lambda b, s, t: (b, 0, s * n_inner + t)),   # labels
            ],
            out_specs=pl.BlockSpec((1, 1, 1, 1),
                                   lambda b, s, t: (b, s, 0, 0)),        # partial sums
            scratch_shapes=[pltpu.VMEM((1, tile), jnp.float32)],
        ),
        compiler_params=pltpu.CompilerParams(
            dimension_semantics=("parallel", "parallel", "arbitrary"),
            vmem_limit_bytes=48 * 1024 * 1024),
        cost_estimate=cost,
    )(x, y)

    return jnp.sum(partials) / N                        # loss.mean()


def _reference(logits, label, *, num_classes, gamma=1, lb_smooth=0.1):
    """Pure-JAX transcription of the PyTorch forward (ignore_index=None)."""
    x = logits.astype(jnp.float32)
    p = jax.nn.softmax(x, axis=1)                       # F.softmax(logits): dim=1 for 4D
    logs = jax.nn.log_softmax(x, axis=1)                # nn.LogSoftmax(dim=1)
    onehot = jax.nn.one_hot(label, num_classes, axis=1, dtype=jnp.float32)
    pt = onehot * p
    dl = (1.0 - pt) ** float(gamma)
    lb_pos = 1.0 - lb_smooth
    lb_neg = lb_smooth / (num_classes - 1)
    lb_one_hot = onehot * lb_pos + (1.0 - onehot) * lb_neg
    loss = -jnp.sum(dl * logs * lb_one_hot, axis=1)     # (B, H, W)
    return loss.mean()


if __name__ == "__main__":
    key = jax.random.PRNGKey(0)

    cases = [
        # (B, C, H, W, gamma, pixel_tile, logits_dtype)
        (2, 4, 16, 16, 1, None, jnp.float32),    # module-default small shape, single tile
        (2, 19, 16, 32, 2, 128, jnp.float32),    # multi-tile accumulation + split + gamma=2
        (1, 5, 10, 13, 1, None, jnp.float32),    # pixel count not a multiple of 128
        (1, 3, 20, 20, 1, 256, jnp.float32),     # ragged last tile (masked) + split axis
        (2, 4, 16, 16, 1, None, jnp.bfloat16),   # bf16 logits stay bf16 in HBM
    ]
    for idx, (B, C, H, W, gamma, pixel_tile, dtype) in enumerate(cases):
        k1, k2 = jax.random.split(jax.random.fold_in(key, idx))
        logits = jax.random.normal(k1, (B, C, H, W), dtype=jnp.float32).astype(dtype)
        label = jax.random.randint(k2, (B, H, W), 0, C, dtype=jnp.int32)

        loss = focal_loss_with_smoothing(logits, label, num_classes=C,
                                         gamma=gamma, lb_smooth=0.1,
                                         pixel_tile=pixel_tile)
        loss = jax.block_until_ready(loss)

        ref = _reference(logits, label, num_classes=C, gamma=gamma, lb_smooth=0.1)
        assert jnp.allclose(loss, ref, rtol=2e-5, atol=2e-5), (idx, loss, ref)

    print("KERNEL_OK")
</pallas_src>

<mosaic_0001>
module attributes {stable_mosaic.version = 11 : i64} {
  func.func @_focal_smooth_kernel(%arg0: i32, %arg1: i32, %arg2: i32, %arg3: memref<1x4x256xf32, #tpu.memory_space<vmem>>, %arg4: memref<1x1x256xi32, #tpu.memory_space<vmem>>, %arg5: memref<1x1x1x1xf32, #tpu.memory_space<vmem>>, %arg6: memref<1x256xf32, #tpu.memory_space<vmem>>) attributes {dimension_semantics = [#tpu.dimension_semantics<parallel>, #tpu.dimension_semantics<parallel>, #tpu.dimension_semantics<arbitrary>], iteration_bounds = array<i64: 2, 1, 1>, scalar_prefetch = 0 : i64, scratch_operands = 1 : i64, tpu.core_type = #tpu.core_type<tc>, window_params = [{transform_indices = @transform_0, window_bounds = array<i64: 1, 4, 256>}, {transform_indices = @transform_1, window_bounds = array<i64: 1, 1, 256>}, {transform_indices = @transform_2, window_bounds = array<i64: 1, 1, 1, 1>}]} {
    %c0_i32 = arith.constant 0 : i32
    %0 = arith.cmpi eq, %arg2, %c0_i32 : i32
    %1 = arith.extui %0 : i1 to i32
    %c0_i32_0 = arith.constant 0 : i32
    %2 = arith.cmpi ne, %1, %c0_i32_0 : i32
    scf.if %2 {
      %cst_24 = arith.constant 0.000000e+00 : f32
      %53 = vector.broadcast %cst_24 : f32 to vector<1x256xf32>
      %c0_25 = arith.constant 0 : index
      %c0_26 = arith.constant 0 : index
      %54 = vector.load %arg6[%c0_25, %c0_26] : memref<1x256xf32, #tpu.memory_space<vmem>>, vector<1x256xf32>
      tpu.vector_store %arg6[%c0_25, %c0_26], %53 {strides = array<i32>} : memref<1x256xf32, #tpu.memory_space<vmem>>, vector<1x256xf32>,
    } else {
    }
    %c0 = arith.constant 0 : index
    %c0_1 = arith.constant 0 : index
    %c0_2 = arith.constant 0 : index
    %3 = vector.load %arg3[%c0, %c0_1, %c0_2] : memref<1x4x256xf32, #tpu.memory_space<vmem>>, vector<1x4x256xf32>
    %4 = vector.shape_cast %3 : vector<1x4x256xf32> to vector<4x256xf32>
    %c0_3 = arith.constant 0 : index
    %c0_4 = arith.constant 0 : index
    %c0_5 = arith.constant 0 : index
    %5 = vector.load %arg4[%c0_3, %c0_4, %c0_5] : memref<1x1x256xi32, #tpu.memory_space<vmem>>, vector<1x1x256xi32>
    %6 = vector.shape_cast %5 : vector<1x1x256xi32> to vector<1x256xi32>
    %cst = arith.constant dense<0xFF800000> : vector<256xf32>
    %7 = vector.multi_reduction <maximumf>, %4, %cst [0] : vector<4x256xf32> to vector<256xf32>
    %8 = vector.shape_cast %7 : vector<256xf32> to vector<1x256xf32>
    %cst_6 = arith.constant dense<0.000000e+00> : vector<256xf32>
    %9 = vector.multi_reduction <add>, %4, %cst_6 [0] : vector<4x256xf32> to vector<256xf32>
    %10 = vector.shape_cast %9 : vector<256xf32> to vector<1x256xf32>
    %11 = tpu.iota {dimensions = array<i32: 0>} : vector<4x256xi32>
    %12 = vector.broadcast %6 : vector<1x256xi32> to vector<4x256xi32>
    %13 = arith.cmpi eq, %11, %12 : vector<4x256xi32>
    %cst_7 = arith.constant 0.000000e+00 : f32
    %14 = vector.broadcast %cst_7 : f32 to vector<4x256xf32>
    %15 = arith.select %13, %4, %14 : vector<4x256xi1>, vector<4x256xf32>
    %cst_8 = arith.constant dense<0.000000e+00> : vector<256xf32>
    %16 = vector.multi_reduction <add>, %15, %cst_8 [0] : vector<4x256xf32> to vector<256xf32>
    %17 = vector.shape_cast %16 : vector<256xf32> to vector<1x256xf32>
    %18 = vector.broadcast %8 : vector<1x256xf32> to vector<4x256xf32>
    %19 = arith.subf %4, %18 : vector<4x256xf32>
    %20 = math.exp %19 : vector<4x256xf32>
    %cst_9 = arith.constant dense<0.000000e+00> : vector<256xf32>
    %21 = vector.multi_reduction <add>, %20, %cst_9 [0] : vector<4x256xf32> to vector<256xf32>
    %22 = vector.shape_cast %21 : vector<256xf32> to vector<1x256xf32>
    %23 = math.log %22 : vector<1x256xf32>
    %24 = arith.subf %17, %8 : vector<1x256xf32>
    %25 = arith.subf %24, %23 : vector<1x256xf32>
    %cst_10 = arith.constant 4.000000e+00 : f32
    %26 = vector.broadcast %cst_10 : f32 to vector<1x256xf32>
    %27 = arith.mulf %26, %8 : vector<1x256xf32>
    %28 = arith.subf %10, %27 : vector<1x256xf32>
    %cst_11 = arith.constant 4.000000e+00 : f32
    %29 = vector.broadcast %cst_11 : f32 to vector<1x256xf32>
    %30 = arith.mulf %29, %23 : vector<1x256xf32>
    %31 = arith.subf %28, %30 : vector<1x256xf32>
    %32 = math.exp %25 : vector<1x256xf32>
    %cst_12 = arith.constant 1.000000e+00 : f32
    %33 = vector.broadcast %cst_12 : f32 to vector<1x256xf32>
    %34 = arith.subf %33, %32 : vector<1x256xf32>
    %cst_13 = arith.constant 0.000000e+00 : f32
    %35 = vector.broadcast %cst_13 : f32 to vector<1x256xf32>
    %36 = arith.maximumf %34, %35 : vector<1x256xf32>
    %cst_14 = arith.constant 0.899999976 : f32
    %37 = vector.broadcast %cst_14 : f32 to vector<1x256xf32>
    %38 = arith.mulf %37, %36 : vector<1x256xf32>
    %cst_15 = arith.constant 0.0333333351 : f32
    %39 = vector.broadcast %cst_15 : f32 to vector<1x256xf32>
    %40 = arith.subf %38, %39 : vector<1x256xf32>
    %41 = arith.mulf %40, %25 : vector<1x256xf32>
    %cst_16 = arith.constant 0.0333333351 : f32
    %42 = vector.broadcast %cst_16 : f32 to vector<1x256xf32>
    %43 = arith.mulf %42, %31 : vector<1x256xf32>
    %44 = arith.addf %41, %43 : vector<1x256xf32>
    %cst_17 = arith.constant 0.000000e+00 : f32
    %45 = vector.broadcast %cst_17 : f32 to vector<1x256xf32>
    %46 = arith.subf %45, %44 : vector<1x256xf32>
    %c0_18 = arith.constant 0 : index
    %c0_19 = arith.constant 0 : index
    %47 = vector.load %arg6[%c0_18, %c0_19] : memref<1x256xf32, #tpu.memory_space<vmem>>, vector<1x256xf32>
    %48 = arith.addf %47, %46 : vector<1x256xf32>
    %c0_20 = arith.constant 0 : index
    %c0_21 = arith.constant 0 : index
    %49 = vector.load %arg6[%c0_20, %c0_21] : memref<1x256xf32, #tpu.memory_space<vmem>>, vector<1x256xf32>
    tpu.vector_store %arg6[%c0_20, %c0_21], %48 {strides = array<i32>} : memref<1x256xf32, #tpu.memory_space<vmem>>, vector<1x256xf32>,
    %c0_i32_22 = arith.constant 0 : i32
    %50 = arith.cmpi eq, %arg2, %c0_i32_22 : i32
    %51 = arith.extui %50 : i1 to i32
    %c0_i32_23 = arith.constant 0 : i32
    %52 = arith.cmpi ne, %51, %c0_i32_23 : i32
    scf.if %52 {
      %c0_24 = arith.constant 0 : index
      %c0_25 = arith.constant 0 : index
      %53 = vector.load %arg6[%c0_24, %c0_25] : memref<1x256xf32, #tpu.memory_space<vmem>>, vector<1x256xf32>
      %54 = vector.shape_cast %53 : vector<1x256xf32> to vector<1x1x256xf32>
      %cst_26 = arith.constant dense<0.000000e+00> : vector<1xf32>
      %55 = vector.multi_reduction <add>, %54, %cst_26 [1, 2] : vector<1x1x256xf32> to vector<1xf32>
      %56 = vector.shape_cast %55 : vector<1xf32> to vector<1x1x1xf32>
      %57 = vector.extract %56[0, 0, 0] : f32 from vector<1x1x1xf32>
      %58 = vector.broadcast %57 : f32 to vector<1x1x1x1xf32>
      %c0_27 = arith.constant 0 : index
      %c0_28 = arith.constant 0 : index
      %c0_29 = arith.constant 0 : index
      %c0_30 = arith.constant 0 : index
      %59 = vector.load %arg5[%c0_27, %c0_28, %c0_29, %c0_30] : memref<1x1x1x1xf32, #tpu.memory_space<vmem>>, vector<1x1x1x1xf32>
      tpu.vector_store %arg5[%c0_27, %c0_28, %c0_29, %c0_30], %58 {strides = array<i32>} : memref<1x1x1x1xf32, #tpu.memory_space<vmem>>, vector<1x1x1x1xf32>,
    } else {
    }
    return
  }
  func.func @transform_0(%arg0: i32, %arg1: i32, %arg2: i32) -> (i32, i32, i32) {
    %c1_i32 = arith.constant 1 : i32
    %0 = arith.muli %arg1, %c1_i32 : i32
    %1 = arith.addi %0, %arg2 : i32
    %c0_i32 = arith.constant 0 : i32
    %c0_i32_0 = arith.constant 0 : i32
    return %arg0, %c0_i32, %1 : i32, i32, i32
  }
  func.func @transform_1(%arg0: i32, %arg1: i32, %arg2: i32) -> (i32, i32, i32) {
    %c1_i32 = arith.constant 1 : i32
    %0 = arith.muli %arg1, %c1_i32 : i32
    %1 = arith.addi %0, %arg2 : i32
    %c0_i32 = arith.constant 0 : i32
    %c0_i32_0 = arith.constant 0 : i32
    return %arg0, %c0_i32, %1 : i32, i32, i32
  }
  func.func @transform_2(%arg0: i32, %arg1: i32, %arg2: i32) -> (i32, i32, i32, i32) {
    %c0_i32 = arith.constant 0 : i32
    %c0_i32_0 = arith.constant 0 : i32
    %c0_i32_1 = arith.constant 0 : i32
    return %arg0, %arg1, %c0_i32, %c0_i32_0 : i32, i32, i32, i32
  }
}

</mosaic_0001>

<llo_original>
// kernel: tpu_custom_call.1
$region0: #{tpu_custom_call.1}
  #allocation0 [shape = 'u32[]', space=smem, size = 0x4, offset = 0x4, fixed_abs, tag = 'smem constant byte address 0x4 - core index']
  #allocation1 [shape = 'u32[144,128]{1,0:T(1,128)}', space=vmem, size = 0x12000, scoped, tag = 'internal scratch']
  #allocation2 [shape = 'f32[1,256]{1,0:T(1,128)}', space=vmem, size = 0x400, scoped, tag = 'scratch operand']
  %s0 = inlined_call_operand.hbm [shape: f32[2,4,256], index: 0, kind: input, shape index: {}]
  %s1 = inlined_call_operand.hbm [shape: s32[2,1,256], index: 1, kind: input, shape index: {}]
  %s2 = inlined_call_operand.vmem [shape: f32[2,1,1,1], index: 2, kind: output, shape index: {}]
  %s3 = sld [smem:[#allocation0]]
  $region57: #{tpu_custom_call.1} parent=0
    _
  %s5 = ssub.s32 1, %s3
  %s6 = scalar_select 0, %s5, %s3
  $region1: #{tpu_custom_call.1} parent=0
    #allocation3 [shape = 'u8[8192]{0}', space=vmem, size = 0x2000, scoped, tag = 'input window, operand 0']
    #allocation4 [shape = 's32[2]{0}', space=sflag, size = 0x8, scoped, tag = 'scoped memory for tpu_custom_call.1']
    #allocation5 [shape = 'u8[2048]{0}', space=vmem, size = 0x800, scoped, tag = 'input window, operand 1']
    #allocation6 [shape = 's32[2]{0}', space=sflag, size = 0x8, scoped, tag = 'scoped memory for tpu_custom_call.1']
    %7 = vsyncpa [#allocation4], 0
    %s8 = scalar_lea.sflag [#allocation4], 1
    %9 = vsyncpa %s8, 0
    %10 = vsyncpa [#allocation6], 0
    %s11 = scalar_lea.sflag [#allocation6], 1
    %12 = vsyncpa %s11, 0
    loop: start=0, step=1, limit=4
    $region2: #{tpu_custom_call.1} parent=1 // loop_pre_header
      _
    $region3: #{tpu_custom_call.1} parent=1 // loop_header
      %s14 = sphi 0, %s18
      %p15 = scmp.ge.s32.totalorder %s14, 4
      %s21 = sphi 0, %s40
      %s22 = sphi 0, %s36
      %s23 = sphi 0, %s32
      %s24 = sphi 0, %s21
      %s25 = sphi 0, %s22
      %s26 = sphi 0, %s23
      %s27 = sphi 0, %s24
      %s28 = sphi 0, %s25
      %s29 = sphi 0, %s26
      %s47 = sphi 0, %s49
      %s50 = sphi 0, %s47
      %s51 = sphi 0, %s50
      %s67 = sphi 0, %s51
      %s77 = sphi 0, %s79
      %s80 = sphi 0, %s77
      %s81 = sphi 0, %s80
      %s97 = sphi 0, %s81
      %s105 = sphi 0, %s107
      %s108 = sphi 0, %s105
      %s109 = sphi 0, %s108
      %s125 = sphi 0, %s109
    $region4: #{tpu_custom_call.1} parent=1 // loop_header_branch
      %17 = sbr.rel (%p15) target = $region8
    $region5: #{tpu_custom_call.1} parent=1 // loop_body
      %s19 = ssub.s32 %s14, 1
      %s20 = ssub.s32 %s14, 2
      %s30 = sadd.s32 1, %s23
      %p31 = scmp.ge.s32.totalorder %s30, 1
      %s32 = scalar_select %p31, 0, %s30
      %s33 = sadd.s32 1, %s22
      %s34 = scalar_select %p31, %s33, %s22
      %p35 = scmp.ge.s32.totalorder %s34, 1
      %s36 = scalar_select %p35, 0, %s34
      %s37 = sadd.s32 1, %s21
      %s38 = scalar_select %p35, %s37, %s21
      %p39 = scmp.ge.s32.totalorder %s38, 2
      %s40 = scalar_select %p39, 0, %s38
      %s41 = sadd.s32 %s22, %s23
      %s42 = sadd.s32 %s36, %s32
      %s43 = ssub.s32 %s21, %s40
      %s44 = ssub.s32 %s41, %s42
      %s45 = sor.u32 %s43, %s44
      %p46 = scmp.eq.s32.totalorder %s45, 0
      %s48 = sadd.s32 %s47, 1
      %s49 = scalar_select %p46, %s47, %s48
      %p52 = pneg %p46
      %p53 = scmp.eq.s32.totalorder %s14, 1
      %p54 = por %p52, %p53
      %p55 = scmp.ne.s32.totalorder %s47, %s50
      %p56 = scmp.eq.s32.totalorder %s14, 0
      %p57 = por %p55, %p56
      %p58 = scmp.ne.s32.totalorder %s47, %s50
      %p59 = scmp.eq.s32.totalorder %s19, 1
      %p60 = por %p58, %p59
      %p61 = scmp.ne.s32.totalorder %s50, %s51
      %p62 = scmp.eq.s32.totalorder %s19, 0
      %p63 = por %p61, %p62
      %p64 = scmp.ne.s32.totalorder %s50, %s51
      %p65 = scmp.eq.s32.totalorder %s20, 1
      %p66 = por %p64, %p65
      %p68 = scmp.ne.s32.totalorder %s51, %s67
      %p69 = scmp.eq.s32.totalorder %s20, 0
      %p70 = por %p68, %p69
      %s71 = sadd.s32 %s22, %s23
      %s72 = sadd.s32 %s36, %s32
      %s73 = ssub.s32 %s21, %s40
      %s74 = ssub.s32 %s71, %s72
      %s75 = sor.u32 %s73, %s74
      %p76 = scmp.eq.s32.totalorder %s75, 0
      %s78 = sadd.s32 %s77, 1
      %s79 = scalar_select %p76, %s77, %s78
      %p82 = pneg %p76
      %p83 = scmp.eq.s32.totalorder %s14, 1
      %p84 = por %p82, %p83
      %p85 = scmp.ne.s32.totalorder %s77, %s80
      %p86 = scmp.eq.s32.totalorder %s14, 0
      %p87 = por %p85, %p86
      %p88 = scmp.ne.s32.totalorder %s77, %s80
      %p89 = scmp.eq.s32.totalorder %s19, 1
      %p90 = por %p88, %p89
      %p91 = scmp.ne.s32.totalorder %s80, %s81
      %p92 = scmp.eq.s32.totalorder %s19, 0
      %p93 = por %p91, %p92
      %p94 = scmp.ne.s32.totalorder %s80, %s81
      %p95 = scmp.eq.s32.totalorder %s20, 1
      %p96 = por %p94, %p95
      %p98 = scmp.ne.s32.totalorder %s81, %s97
      %p99 = scmp.eq.s32.totalorder %s20, 0
      %p100 = por %p98, %p99
      %s101 = ssub.s32 %s21, %s40
      %s102 = ssub.s32 %s22, %s36
      %s103 = sor.u32 %s101, %s102
      %p104 = scmp.eq.s32.totalorder %s103, 0
      %s106 = sadd.s32 %s105, 1
      %s107 = scalar_select %p104, %s105, %s106
      %p110 = pneg %p104
      %p111 = scmp.eq.s32.totalorder %s14, 1
      %p112 = por %p110, %p111
      %p113 = scmp.ne.s32.totalorder %s105, %s108
      %p114 = scmp.eq.s32.totalorder %s14, 0
      %p115 = por %p113, %p114
      %p116 = scmp.ne.s32.totalorder %s105, %s108
      %p117 = scmp.eq.s32.totalorder %s19, 1
      %p118 = por %p116, %p117
      %p119 = scmp.ne.s32.totalorder %s108, %s109
      %p120 = scmp.eq.s32.totalorder %s19, 0
      %p121 = por %p119, %p120
      %p122 = scmp.ne.s32.totalorder %s108, %s109
      %p123 = scmp.eq.s32.totalorder %s20, 1
      %p124 = por %p122, %p123
      %p126 = scmp.ne.s32.totalorder %s109, %s125
      %p127 = scmp.eq.s32.totalorder %s20, 0
      %p128 = por %p126, %p127
      %p129 = scmp.le.s32.totalorder 1, %s14
      %p130 = scmp.lt.s32.totalorder %s14, 3
      %p131 = pnand %p129, %p130
      %p132 = pneg %p131
      // Predicated region
      $region9: #{tpu_custom_call.1} parent=5 // pred_check
        _
      $region10: #{tpu_custom_call.1} parent=5 // pred_check_branch
        %134 = sbr.rel (%p131) target = $region12
      $region11: #{tpu_custom_call.1} parent=5 // pred_region
        %s135 = ssub.s32 %s14, 1
      $region12: #{tpu_custom_call.1} parent=5 // pred_fallthru
        _
      %p136 = scmp.lt.s32.totalorder %s14, 2
      // Predicated region
      $region13: #{tpu_custom_call.1} parent=5 // pred_check
        %p137 = pneg %p136
      $region14: #{tpu_custom_call.1} parent=5 // pred_check_branch
        %139 = sbr.rel (%p137) target = $region16
      $region15: #{tpu_custom_call.1} parent=5 // pred_region
        // Predicated region
        $region17: #{tpu_custom_call.1} parent=15 // pred_check
          %p140 = pneg %p57
        $region18: #{tpu_custom_call.1} parent=15 // pred_check_branch
          %142 = sbr.rel (%p140) target = $region20
        $region19: #{tpu_custom_call.1} parent=15 // pred_region
          %s143 = sand.u32 %s47, 1
          %s144 = scalar_lea.sflag [#allocation4], %s143
          %s145 = sand.u32 %s47, 1
          %s146 = smul.addr %s145, 8
          %s147 = scalar_lea.vmem [#allocation3], %s146
          %s148 = sadd.s32 %s22, %s23
          %s149 = smul.u32 2, %s148
          %s151 = ssub.s32 128, 128
          %152 = vsyncadd %s144, %s151
          %s153 = smul.addr %s21, 2
          %s154 = sadd.s32 %s149, %s153
          %s155 = smul.addr %s154, 64
          %s156 = scalar_lea.hbm %s0, %s155
          %s158 = sshll.u32 %s147, 4
          %s159 = int_to_ptr.vmem [resolvable:$true] %s158
          %161 = dma.hbm_to_vmem [thread:$0]  %s156, 128, %s159, %s144
        $region20: #{tpu_custom_call.1} parent=15 // pred_fallthru
          _
        // Predicated region
        $region21: #{tpu_custom_call.1} parent=15 // pred_check
          %p162 = pneg %p87
        $region22: #{tpu_custom_call.1} parent=15 // pred_check_branch
          %164 = sbr.rel (%p162) target = $region24
        $region23: #{tpu_custom_call.1} parent=15 // pred_region
          %s165 = sand.u32 %s77, 1
          %s166 = scalar_lea.sflag [#allocation6], %s165
          %s167 = sand.u32 %s77, 1
          %s168 = smul.addr %s167, 2
          %s169 = scalar_lea.vmem [#allocation5], %s168
          %s170 = sadd.s32 %s22, %s23
          %s171 = smul.u32 2, %s170
          %s173 = ssub.s32 32, 32
          %174 = vsyncadd %s166, %s173
          %s175 = smul.addr %s21, 2
          %s176 = sadd.s32 %s171, %s175
          %s177 = smul.addr %s176, 16
          %s178 = scalar_lea.hbm %s1, %s177
          %s180 = sshll.u32 %s169, 4
          %s181 = int_to_ptr.vmem [resolvable:$true] %s180
          %183 = dma.hbm_to_vmem [thread:$0]  %s178, 32, %s181, %s166
        $region24: #{tpu_custom_call.1} parent=15 // pred_fallthru
          _
      $region16: #{tpu_custom_call.1} parent=5 // pred_fallthru
        _
      %p184 = scmp.le.s32.totalorder 1, %s14
      %p185 = scmp.lt.s32.totalorder %s14, 3
      %p186 = pnand %p184, %p185
      %p187 = pneg %p186
      // Predicated region
      $region25: #{tpu_custom_call.1} parent=5 // pred_check
        _
      $region26: #{tpu_custom_call.1} parent=5 // pred_check_branch
        %189 = sbr.rel (%p186) target = $region28
      $region27: #{tpu_custom_call.1} parent=5 // pred_region
        %s190 = ssub.s32 %s14, 1
        %s191 = sand.u32 %s50, 1
        %s192 = scalar_lea.sflag [#allocation4], %s191
        %s193 = sand.u32 %s50, 1
        %s194 = smul.addr %s193, 8
        %s195 = scalar_lea.vmem [#allocation3], %s194
        // Predicated region
        $region29: #{tpu_custom_call.1} parent=27 // pred_check
          %p196 = pneg %p63
        $region30: #{tpu_custom_call.1} parent=27 // pred_check_branch
          %198 = sbr.rel (%p196) target = $region32
        $region31: #{tpu_custom_call.1} parent=27 // pred_region
          %199 = dma.done %s192, 128
        $region32: #{tpu_custom_call.1} parent=27 // pred_fallthru
          _
        %s200 = sand.u32 %s80, 1
        %s201 = scalar_lea.sflag [#allocation6], %s200
        %s202 = sand.u32 %s80, 1
        %s203 = smul.addr %s202, 2
        %s204 = scalar_lea.vmem [#allocation5], %s203
        // Predicated region
        $region33: #{tpu_custom_call.1} parent=27 // pred_check
          %p205 = pneg %p93
        $region34: #{tpu_custom_call.1} parent=27 // pred_check_branch
          %207 = sbr.rel (%p205) target = $region36
        $region35: #{tpu_custom_call.1} parent=27 // pred_region
          %208 = dma.done %s201, 32
        $region36: #{tpu_custom_call.1} parent=27 // pred_fallthru
          _
        %s209 = sand.u32 %s50, 1
        %s210 = scalar_lea.sflag [#allocation4], %s209
        %s211 = sand.u32 %s50, 1
        %s212 = smul.addr %s211, 8
        %s213 = scalar_lea.vmem [#allocation3], %s212
        %p214 = pneg %p63
        %p215 = pneg %p60
        %s216 = sand.u32 %s80, 1
        %s217 = scalar_lea.sflag [#allocation6], %s216
        %s218 = sand.u32 %s80, 1
        %s219 = smul.addr %s218, 2
        %s220 = scalar_lea.vmem [#allocation5], %s219
        %p221 = pneg %p93
        %p222 = pneg %p90
        %p223 = pneg %p121
        %p224 = pneg %p118
        %p225 = scmp.lt.s32.totalorder %s24, 1
        %s226 = scalar_select %p225, %s24, 1
        %p227 = scmp.lt.s32.totalorder %s25, 0
        %s228 = scalar_select %p227, %s25, 0
        %s229 = sadd.s32 %s228, %s226
        %s230 = scalar_lea.vmem %s2, %s229
        %s231 = sadd.s32 %s25, %s26
        %s232 = smul.u32 2, %s231
        %s233 = sadd.s32 %s25, %s26
        %s234 = smul.u32 2, %s233
        %p235 = scmp.lt.s32.totalorder %s24, 1
        %s236 = scalar_select %p235, %s24, 1
        %p237 = scmp.lt.s32.totalorder %s25, 0
        %s238 = scalar_select %p237, %s25, 0
        %s239 = sadd.s32 %s238, %s236
        %s240 = scalar_lea.vmem %s2, %s239
        %p241 = scmp.eq.s32.totalorder %s26, 0
        // Predicated region
        $region37: #{tpu_custom_call.1} parent=27 // pred_check
          %p242 = pneg %p241
        $region38: #{tpu_custom_call.1} parent=27 // pred_check_branch
          %244 = sbr.rel (%p242) target = $region40
        $region39: #{tpu_custom_call.1} parent=27 // pred_region
          %v245 = vlaneseq
          %vm246 = vcmp.ge.s32.totalorder %v245, 0
          %vm247 = vcmp.lt.s32.totalorder %v245, 256
          %vm248 = vmand %vm246, %vm247
          %249 = vst.msk [vmem:[#allocation2] sm:$0x3] %vm248, 0.0
        $region40: #{tpu_custom_call.1} parent=27 // pred_fallthru
          _
        %v250 = vld [vmem:[%s195] sm:$0xff]
        %v251 = vld [vmem:[%s204] sm:$0x3]
        %v253 = vcombine.high %v250, %v250
        %vm255 = vcmask 1043456
        %v256 = vsel %vm255, %v250, -inf
        %v257 = vrot.slane %v256, 4
        %v258 = vmax.f32 %v256, %v257
        %v259 = vrot.slane %v258, 2
        %v260 = vmax.f32 %v258, %v259
        %v261 = vrot.slane %v260, 1
        %v262 = vmax.f32 %v260, %v261
        %v263 = vsel %vm255, %v253, -inf
        %v264 = vrot.slane %v263, 4
        %v265 = vmax.f32 %v263, %v264
        %v266 = vrot.slane %v265, 2
        %v267 = vmax.f32 %v265, %v266
        %v268 = vrot.slane %v267, 1
        %v269 = vmax.f32 %v267, %v268
        %v270 = vsel %vm255, %v250, 0.0
        %v271 = vrot.slane %v270, 4
        %v272 = vadd.f32 %v270, %v271
        %v273 = vrot.slane %v272, 2
        %v274 = vadd.f32 %v272, %v273
        %v275 = vrot.slane %v274, 1
        %v276 = vadd.f32 %v274, %v275
        %v277 = vsel %vm255, %v253, 0.0
        %v278 = vrot.slane %v277, 4
        %v279 = vadd.f32 %v277, %v278
        %v280 = vrot.slane %v279, 2
        %v281 = vadd.f32 %v279, %v280
        %v282 = vrot.slane %v281, 1
        %v283 = vadd.f32 %v281, %v282
        %v284 = vlaneseq
        %v285 = vshrl.u32 %v284, 7
        %v286 = vlaneseq
        %v287 = vshrl.u32 %v286, 7
        %v288 = vsub.s32 0, %v287
        %v289 = vrot.slane %v251, %v288
        %v290 = vlaneseq
        %v291 = vshrl.u32 %v290, 7
        %v292 = vsub.s32 1, %v291
        %v293 = vrot.slane %v251, %v292
        %vm294 = vcmp.eq.s32.totalorder %v285, %v289
        %vm295 = vcmp.eq.s32.totalorder %v285, %v293
        %v296 = vsel %vm294, %v250, 0.0
        %v297 = vsel %vm295, %v253, 0.0
        %v298 = vsel %vm255, %v296, 0.0
        %v299 = vrot.slane %v298, 4
        %v300 = vadd.f32 %v298, %v299
        %v301 = vrot.slane %v300, 2
        %v302 = vadd.f32 %v300, %v301
        %v303 = vrot.slane %v302, 1
        %v304 = vadd.f32 %v302, %v303
        %v305 = vsel %vm255, %v297, 0.0
        %v306 = vrot.slane %v305, 4
        %v307 = vadd.f32 %v305, %v306
        %v308 = vrot.slane %v307, 2
        %v309 = vadd.f32 %v307, %v308
        %v310 = vrot.slane %v309, 1
        %v311 = vadd.f32 %v309, %v310
        %v314 = vcombine.low %v262, %v269
        %v316 = vsub.f32 %v250, %v314
        %v317 = vmul.f32 %v316, 1.442695
        %v318 = vpow.pop %v317
        %v320 = vcombine.high %v318, %v318
        %v322 = vsel %vm255, %v318, 0.0
        %v323 = vrot.slane %v322, 4
        %v324 = vadd.f32 %v322, %v323
        %v325 = vrot.slane %v324, 2
        %v326 = vadd.f32 %v324, %v325
        %v327 = vrot.slane %v326, 1
        %v328 = vadd.f32 %v326, %v327
        %v329 = vsel %vm255, %v320, 0.0
        %v330 = vrot.slane %v329, 4
        %v331 = vadd.f32 %v329, %v330
        %v332 = vrot.slane %v331, 2
        %v333 = vadd.f32 %v331, %v332
        %v334 = vrot.slane %v333, 1
        %v335 = vadd.f32 %v333, %v334
        %v336 = vlog2.pop %v328
        %v337 = vmul.f32 %v336, 0.6931472
        %v338 = vlog2.pop %v335
        %v339 = vmul.f32 %v338, 0.6931472
        %v340 = vsub.f32 %v304, %v262
        %v341 = vsub.f32 %v311, %v269
        %v342 = vsub.f32 %v340, %v337
        %v343 = vsub.f32 %v341, %v339
        %v344 = vmul.f32 %v262, 4.0
        %v345 = vmul.f32 %v269, 4.0
        %v346 = vsub.f32 %v276, %v344
        %v347 = vsub.f32 %v283, %v345
        %v348 = vmul.f32 %v337, 4.0
        %v349 = vmul.f32 %v339, 4.0
        %v350 = vsub.f32 %v346, %v348
        %v351 = vsub.f32 %v347, %v349
        %v352 = vmul.f32 %v342, 1.442695
        %v353 = vpow.pop %v352
        %v354 = vmul.f32 %v343, 1.442695
        %v355 = vpow.pop %v354
        %v356 = vsub.f32 1.0, %v353
        %v357 = vsub.f32 1.0, %v355
        %v358 = vmax.f32 %v356, 0.0
        %v359 = vmax.f32 %v357, 0.0
        %v360 = vmul.f32 %v358, 0.9
        %v361 = vmul.f32 %v359, 0.9
        %v362 = vsub.f32 %v360, 0.033333335
        %v363 = vsub.f32 %v361, 0.033333335
        %v364 = vmul.f32 %v362, %v342
        %v365 = vmul.f32 %v363, %v343
        %v366 = vmul.f32 %v350, 0.033333335
        %v367 = vmul.f32 %v351, 0.033333335
        %v368 = vadd.f32 %v364, %v366
        %v369 = vadd.f32 %v365, %v367
        %v370 = vsub.f32 0.0, %v368
        %v371 = vsub.f32 0.0, %v369
        %v372 = vld [vmem:[#allocation2] sm:$0x3]
        %v375 = vcombine.low %v370, %v371
        %v377 = vunpack.c.l.s4 1966171168
        %v378 = vunpack.c.0.s8 %v377
        %v379 = vlaneseq
        %v380 = vshrl.u32 %v379, 7
        %v381 = vsub.s32 %v378, %v380
        %v382 = vrot.slane %v375, %v381
        %v384 = vunpack.c.l.s4 1966171168
        %v385 = vunpack.c.0.s8 %v384
        %v386 = vlaneseq
        %v387 = vshrl.u32 %v386, 7
        %v388 = vsub.s32 %v385, %v387
        %v389 = vrot.slane %v382, %v388
        %v391 = vadd.f32 %v372, %v389
        %v392 = vlaneseq
        %vm393 = vcmp.ge.s32.totalorder %v392, 0
        %vm394 = vcmp.lt.s32.totalorder %v392, 256
        %vm395 = vmand %vm393, %vm394
        %396 = vst.msk [vmem:[#allocation2] sm:$0x3] %vm395, %v391
        // Predicated region
        $region41: #{tpu_custom_call.1} parent=27 // pred_check
          %p397 = pneg %p241
        $region42: #{tpu_custom_call.1} parent=27 // pred_check_branch
          %399 = sbr.rel (%p397) target = $region44
        $region43: #{tpu_custom_call.1} parent=27 // pred_region
          %v400 = vld [vmem:[#allocation2] sm:$0x3]
          %v402 = vlaneseq
          %v403 = vshrl.u32 %v402, 7
          %v404 = vsub.s32 0, %v403
          %v405 = vrot.slane %v400, %v404
          %v406 = vlaneseq
          %v407 = vshrl.u32 %v406, 7
          %v408 = vsub.s32 1, %v407
          %v409 = vrot.slane %v400, %v408
          %vm412 = vcmask 1040384
          %v413 = vsel %vm412, %v405, 0.0
          %v414 = vsel %vm412, %v409, 0.0
          %v415 = vadd.f32 %v413, %v414
          %416 = vadd.xlane.f32.xlu0 %v415
          %v417 = vpop.xlane.xlu0 %416
          %v418 = vrot.slane %v417, 4
          %v419 = vadd.f32 %v417, %v418
          %v420 = vrot.slane %v419, 2
          %v421 = vadd.f32 %v419, %v420
          %v422 = vrot.slane %v421, 1
          %v423 = vadd.f32 %v421, %v422
          %s424 = vtos %v423
          %v425 = vstv %s424
          %vm426 = vcmask 0
          %427 = vst.msk [vmem:[%s240] sm:$0x1] %vm426, %v425
        $region44: #{tpu_custom_call.1} parent=27 // pred_fallthru
          _
        %p428 = scmp.lt.s32.totalorder %s24, 1
        %s429 = scalar_select %p428, %s24, 1
        %p430 = scmp.lt.s32.totalorder %s25, 0
        %s431 = scalar_select %p430, %s25, 0
        %s432 = sadd.s32 %s431, %s429
        %s433 = scalar_lea.vmem %s2, %s432
        // Predicated region
        $region45: #{tpu_custom_call.1} parent=27 // pred_check
          %p434 = pneg %p118
        $region46: #{tpu_custom_call.1} parent=27 // pred_check_branch
          %436 = sbr.rel (%p434) target = $region48
        $region47: #{tpu_custom_call.1} parent=27 // pred_region
          _
        $region48: #{tpu_custom_call.1} parent=27 // pred_fallthru
          _
      $region28: #{tpu_custom_call.1} parent=5 // pred_fallthru
        _
      %p437 = scmp.le.s32.totalorder 2, %s14
      // Predicated region
      $region49: #{tpu_custom_call.1} parent=5 // pred_check
        %p438 = pneg %p437
      $region50: #{tpu_custom_call.1} parent=5 // pred_check_branch
        %440 = sbr.rel (%p438) target = $region52
      $region51: #{tpu_custom_call.1} parent=5 // pred_region
        %s441 = ssub.s32 %s14, 2
        // Predicated region
        $region53: #{tpu_custom_call.1} parent=51 // pred_check
          %p442 = pneg %p124
        $region54: #{tpu_custom_call.1} parent=51 // pred_check_branch
          %444 = sbr.rel (%p442) target = $region56
        $region55: #{tpu_custom_call.1} parent=51 // pred_region
          %p445 = scmp.lt.s32.totalorder %s27, 1
          %s446 = scalar_select %p445, %s27, 1
          %p447 = scmp.lt.s32.totalorder %s28, 0
          %s448 = scalar_select %p447, %s28, 0
          %s449 = sadd.s32 %s448, %s446
          %s450 = scalar_lea.vmem %s2, %s449
        $region56: #{tpu_custom_call.1} parent=51 // pred_fallthru
          _
      $region52: #{tpu_custom_call.1} parent=5 // pred_fallthru
        _
    $region6: #{tpu_custom_call.1} parent=1 // loop_footer
      %s18 = sadd.s32 1, %s14
    $region7: #{tpu_custom_call.1} parent=1 // loop_footer_branch
      %13 = sbr.rel target = $region3
    $region8: #{tpu_custom_call.1} parent=1 // loop_exit
      _
    %451 = vsyncpa [#allocation4], 1
    %s452 = scalar_lea.sflag [#allocation4], 1
    %453 = vsyncpa %s452, 1
    %454 = vsyncpa [#allocation6], 1
    %s455 = scalar_lea.sflag [#allocation6], 1
    %456 = vsyncpa %s455, 1

</llo_original>
